<compile_context>
chip_gen: v7x
topology: tpu7x:2x2x1
jax: 0.10.0
libtpu: 0.0.40
codegen_flags: <defaults>
</compile_context>

<pallas_src>
import functools

import jax
import jax.numpy as jnp
from jax import lax
from jax.experimental import pallas as pl
from jax.experimental.pallas import tpu as pltpu


# dimension_numbers for "A @ B.T": contract the last dim of both operands.
_DN_NT = (((1,), (1,)), ((), ()))


# ----------------------------------------------------------------------------
# Fused per-batch kernel: fused QKV projection + per-head softmax attention +
# single fused output projection (+ bias), all in VMEM.
# ----------------------------------------------------------------------------
def _fused_attention_kernel(x_ref, wqkv_ref, wp_ref, bp_ref, o_ref,
                            qkv_ref, ctx_ref, *, num_heads, head_dim):
    """x_ref: (1,N,C) input dtype; wqkv_ref: (3C,C) bf16 (q rows pre-scaled,
    torch Linear (out,in) layout); wp_ref: (C,C) bf16; bp_ref: (1,C) f32;
    o_ref: (1,N,C); qkv_ref: (N,3C) bf16 scratch; ctx_ref: (N,C) bf16 scratch."""
    C = num_heads * head_dim
    cdt = wqkv_ref.dtype

    # In-kernel cast (VPU, hidden under MXU slack): x stays in its HBM dtype,
    # no wrapper-side bf16 copy round-trip.
    x = x_ref[0].astype(cdt)                                        # (N, C)

    # One fused QKV matmul for ALL heads: (N,C) x (3C,C)^T -> (N,3C), f32 acc.
    # `scale` is already folded into the q rows of wqkv by the wrapper.
    qkv = lax.dot_general(x, wqkv_ref[...], _DN_NT,
                          preferred_element_type=jnp.float32)       # (N,3C) f32
    qkv_ref[...] = qkv.astype(cdt)

    # Per-head softmax attention. Each head's context goes straight into its
    # D-wide lane slice of ctx_ref; nothing accumulates across iterations, so
    # the static unroll keeps a bounded live set per head (the review's
    # fori_loop concern applied to the removed f32 accumulator chain).
    for h in range(num_heads):
        q0 = h * head_dim
        qh = qkv_ref[:, q0:q0 + head_dim]                           # (N, D) bf16 (scaled)
        kh = qkv_ref[:, C + q0:C + q0 + head_dim]                   # (N, D) bf16
        vh = qkv_ref[:, 2 * C + q0:2 * C + q0 + head_dim]           # (N, D) bf16

        s = lax.dot_general(qh, kh, _DN_NT,
                            preferred_element_type=jnp.float32)     # (N, N) f32
        s = s - jnp.max(s, axis=-1, keepdims=True)
        p = jnp.exp(s)
        p = p * pl.reciprocal(jnp.sum(p, axis=-1, keepdims=True), approx=True)

        oh = jnp.dot(p.astype(cdt), vh,
                     preferred_element_type=jnp.float32)            # (N, D) f32
        ctx_ref[:, q0:q0 + head_dim] = oh.astype(cdt)

    # ONE full-contraction output projection after the head loop:
    # (N,C) x (C,C)^T with K = C (full MXU depth), plus bias.
    out = lax.dot_general(ctx_ref[...], wp_ref[...], _DN_NT,
                          preferred_element_type=jnp.float32)       # (N, C) f32
    o_ref[0] = (out + bp_ref[...].astype(jnp.float32)).astype(o_ref.dtype)


def _vmem_limit_bytes(N, C, x_itemsize, out_itemsize, cdt_itemsize):
    """Rough resident-set estimate for the scoped-VMEM limit (with headroom)."""
    est = 0
    est += 2 * N * C * x_itemsize           # x block (double-buffered)
    est += 2 * N * C * out_itemsize         # output block (double-buffered)
    est += 2 * 3 * C * C * cdt_itemsize     # wqkv (double-buffered)
    est += 2 * C * C * cdt_itemsize         # wp
    est += 2 * C * 4                        # bias
    est += N * 3 * C * cdt_itemsize         # qkv scratch
    est += N * C * cdt_itemsize             # ctx scratch
    est += N * 3 * C * 4                    # qkv f32 temporary
    est += 2 * N * N * 4                    # scores / probs f32
    est += N * C * 4                        # proj f32 temporary
    return int(min(max(2 * est, 32 << 20), 100 << 20))


# ----------------------------------------------------------------------------
# Wrapper
# ----------------------------------------------------------------------------
def attention_drop_forward(x, params, num_heads, attention_mask=None,
                           drop_prob=0.0, *, compute_dtype=jnp.bfloat16,
                           out_dtype=None):
    """Pallas implementation of AttentionDrop.forward.

    attn_drop == 0 by construction; proj_drop with drop_prob == 0 is identity.
    `out_dtype` defaults to x.dtype (module parity); pass bf16 to halve the
    writeback traffic if downstream tolerates it.
    """
    assert attention_mask is None   # module's default (mask-free) path
    assert drop_prob == 0.0         # Dropout(p=0) is identity
    C = x.shape[-1]
    B = x.shape[0]
    x3 = x.reshape(B, -1, C)        # (B, N, C)
    N = x3.shape[1]
    H = num_heads
    assert C % H == 0
    D = C // H
    scale = float(D) ** (-0.5)
    out_dtype = x.dtype if out_dtype is None else out_dtype

    # One fused QKV weight (3C, C), torch Linear (out, in) layout, with the
    # attention scale folded into the q rows (O(C^2), once — weight, not x).
    wq = params["wq"].astype(jnp.float32) * scale
    wqkv = jnp.concatenate(
        [wq, params["wk"].astype(jnp.float32), params["wv"].astype(jnp.float32)],
        axis=0).astype(compute_dtype)                               # (3C, C)
    wp = params["wp"].astype(compute_dtype)                         # (C, C)
    bp = params["bp"].astype(jnp.float32).reshape(1, C)             # (1, C)

    kernel = functools.partial(_fused_attention_kernel,
                               num_heads=H, head_dim=D)

    vmem_limit = _vmem_limit_bytes(
        N, C,
        jnp.dtype(x3.dtype).itemsize,
        jnp.dtype(out_dtype).itemsize,
        jnp.dtype(compute_dtype).itemsize)

    out = pl.pallas_call(
        kernel,
        out_shape=jax.ShapeDtypeStruct((B, N, C), out_dtype),
        grid=(B,),
        in_specs=[
            pl.BlockSpec((1, N, C), lambda b: (b, 0, 0)),   # x (per batch)
            pl.BlockSpec((3 * C, C), lambda b: (0, 0)),     # fused Wqkv
            pl.BlockSpec((C, C), lambda b: (0, 0)),         # Wp
            pl.BlockSpec((1, C), lambda b: (0, 0)),         # bp
        ],
        out_specs=pl.BlockSpec((1, N, C), lambda b: (b, 0, 0)),
        scratch_shapes=[
            pltpu.VMEM((N, 3 * C), compute_dtype),          # bf16 q/k/v (all heads)
            pltpu.VMEM((N, C), compute_dtype),              # assembled head outputs
        ],
        compiler_params=pltpu.CompilerParams(
            dimension_semantics=("parallel",),
            vmem_limit_bytes=vmem_limit),
    )(x3, wqkv, wp, bp)

    # proj_drop with p == 0 is identity; result already matches x.view(B, -1, C).
    return out


# ----------------------------------------------------------------------------
# Pure-JAX fp32 reference (mirrors the PyTorch forward) for a correctness check.
# ----------------------------------------------------------------------------
def _reference(x, params, num_heads):
    C = x.shape[-1]
    B = x.shape[0]
    x3 = x.reshape(B, -1, C).astype(jnp.float32)
    N = x3.shape[1]
    H, D = num_heads, C // num_heads
    scale = float(D) ** (-0.5)

    def lin(a, w):  # torch Linear: a @ w.T
        return jnp.einsum("bnc,dc->bnd", a, w)

    q = lin(x3, params["wq"]).reshape(B, N, H, D).transpose(0, 2, 1, 3)
    k = lin(x3, params["wk"]).reshape(B, N, H, D).transpose(0, 2, 1, 3)
    v = lin(x3, params["wv"]).reshape(B, N, H, D).transpose(0, 2, 1, 3)
    attn = jnp.einsum("bhnd,bhmd->bhnm", q, k) * scale
    attn = jax.nn.softmax(attn, axis=-1)
    out = jnp.einsum("bhnm,bhmd->bhnd", attn, v).transpose(0, 2, 1, 3).reshape(B, N, C)
    out = jnp.einsum("bnc,dc->bnd", out, params["wp"]) + params["bp"]
    return out.reshape(B, N, C)


if __name__ == "__main__":
    # Small shapes consistent with the module: dim=32, num_heads=4 (head_dim=8),
    # 4D input (B, wh, ww, C) = (2, 4, 4, 32)  =>  N = 16.
    # NOTE: real model shapes should keep C a multiple of 128 for lane density;
    # the kernel structure is shape-agnostic.
    B, wh, ww, C = 2, 4, 4, 32
    num_heads = 4

    key = jax.random.PRNGKey(0)
    kx, kq, kk, kv, kp, kb = jax.random.split(key, 6)

    x = jax.random.normal(kx, (B, wh, ww, C), dtype=jnp.float32)

    # Deterministic synthetic parameters (torch Linear weight layout: (out, in)).
    params = {
        "wq": 0.05 * jax.random.normal(kq, (C, C), dtype=jnp.float32),  # qkv_bias=False
        "wk": 0.05 * jax.random.normal(kk, (C, C), dtype=jnp.float32),
        "wv": 0.05 * jax.random.normal(kv, (C, C), dtype=jnp.float32),
        "wp": 0.05 * jax.random.normal(kp, (C, C), dtype=jnp.float32),
        "bp": 0.01 * jax.random.normal(kb, (C,), dtype=jnp.float32),
    }

    out = attention_drop_forward(x, params, num_heads)
    out = jax.block_until_ready(out)

    ref = _reference(x, params, num_heads)
    assert out.shape == (B, wh * ww, C)
    # bf16 MXU inputs + approx reciprocal (intentional accuracy trade) => looser
    # tolerance vs the fp32 reference.
    assert jnp.allclose(out, ref, atol=2e-2, rtol=2e-2), float(
        jnp.max(jnp.abs(out - ref)))

    print("KERNEL_OK")
</pallas_src>

<mosaic_0001>
module attributes {stable_mosaic.version = 11 : i64} {
  func.func @_fused_attention_kernel(%arg0: i32, %arg1: memref<1x16x32xf32, #tpu.memory_space<vmem>>, %arg2: memref<96x32xbf16, #tpu.memory_space<vmem>>, %arg3: memref<32x32xbf16, #tpu.memory_space<vmem>>, %arg4: memref<1x32xf32, #tpu.memory_space<vmem>>, %arg5: memref<1x16x32xf32, #tpu.memory_space<vmem>>, %arg6: memref<16x96xbf16, #tpu.memory_space<vmem>>, %arg7: memref<16x32xbf16, #tpu.memory_space<vmem>>) attributes {dimension_semantics = [#tpu.dimension_semantics<parallel>], iteration_bounds = array<i64: 2>, scalar_prefetch = 0 : i64, scratch_operands = 2 : i64, tpu.core_type = #tpu.core_type<tc>, window_params = [{transform_indices = @transform_0, window_bounds = array<i64: 1, 16, 32>}, {pipeline_mode = #tpu.pipeline_mode<synchronous>, transform_indices = @transform_1, window_bounds = array<i64: 96, 32>}, {pipeline_mode = #tpu.pipeline_mode<synchronous>, transform_indices = @transform_2, window_bounds = array<i64: 32, 32>}, {pipeline_mode = #tpu.pipeline_mode<synchronous>, transform_indices = @transform_3, window_bounds = array<i64: 1, 32>}, {transform_indices = @transform_4, window_bounds = array<i64: 1, 16, 32>}]} {
    %c0 = arith.constant 0 : index
    %c0_0 = arith.constant 0 : index
    %c0_1 = arith.constant 0 : index
    %0 = vector.load %arg1[%c0, %c0_0, %c0_1] : memref<1x16x32xf32, #tpu.memory_space<vmem>>, vector<1x16x32xf32>
    %1 = vector.shape_cast %0 : vector<1x16x32xf32> to vector<16x32xf32>
    %2 = arith.truncf %1 : vector<16x32xf32> to vector<16x32xbf16>
    %c0_2 = arith.constant 0 : index
    %c0_3 = arith.constant 0 : index
    %3 = vector.load %arg2[%c0_2, %c0_3] : memref<96x32xbf16, #tpu.memory_space<vmem>>, vector<96x32xbf16>
    %cst = arith.constant dense<0.000000e+00> : vector<16x96xf32>
    %4 = tpu.matmul %2, %3, %cst {dimension_numbers = #tpu.dot_dimension_numbers<[1], [1], [0], [0], [0, 0, 1, 0], [], []>} : vector<16x32xbf16>, vector<96x32xbf16>, vector<16x96xf32> -> vector<16x96xf32>
    %5 = arith.truncf %4 : vector<16x96xf32> to vector<16x96xbf16>
    %c0_4 = arith.constant 0 : index
    %c0_5 = arith.constant 0 : index
    %6 = vector.load %arg6[%c0_4, %c0_5] : memref<16x96xbf16, #tpu.memory_space<vmem>>, vector<16x96xbf16>
    tpu.vector_store %arg6[%c0_4, %c0_5], %5 {strides = array<i32>} : memref<16x96xbf16, #tpu.memory_space<vmem>>, vector<16x96xbf16>,
    %c0_6 = arith.constant 0 : index
    %c0_7 = arith.constant 0 : index
    %7 = vector.load %arg6[%c0_6, %c0_7] : memref<16x96xbf16, #tpu.memory_space<vmem>>, vector<16x8xbf16>
    %c0_8 = arith.constant 0 : index
    %c32 = arith.constant 32 : index
    %8 = vector.load %arg6[%c0_8, %c32] : memref<16x96xbf16, #tpu.memory_space<vmem>>, vector<16x8xbf16>
    %c0_9 = arith.constant 0 : index
    %c64 = arith.constant 64 : index
    %9 = vector.load %arg6[%c0_9, %c64] : memref<16x96xbf16, #tpu.memory_space<vmem>>, vector<16x8xbf16>
    %cst_10 = arith.constant dense<0.000000e+00> : vector<16x16xf32>
    %10 = tpu.matmul %7, %8, %cst_10 {dimension_numbers = #tpu.dot_dimension_numbers<[1], [1], [0], [0], [0, 0, 1, 0], [], []>} : vector<16x8xbf16>, vector<16x8xbf16>, vector<16x16xf32> -> vector<16x16xf32>
    %cst_11 = arith.constant dense<0xFF800000> : vector<16xf32>
    %11 = vector.multi_reduction <maximumf>, %10, %cst_11 [1] : vector<16x16xf32> to vector<16xf32>
    %12 = vector.shape_cast %11 : vector<16xf32> to vector<16x1xf32>
    %13 = vector.broadcast %12 : vector<16x1xf32> to vector<16x16xf32>
    %14 = arith.subf %10, %13 : vector<16x16xf32>
    %15 = math.exp %14 : vector<16x16xf32>
    %cst_12 = arith.constant dense<0.000000e+00> : vector<16xf32>
    %16 = vector.multi_reduction <add>, %15, %cst_12 [1] : vector<16x16xf32> to vector<16xf32>
    %17 = vector.shape_cast %16 : vector<16xf32> to vector<16x1xf32>
    %18 = tpu.reciprocal %17 {approx = true} : vector<16x1xf32> -> vector<16x1xf32>
    %19 = vector.broadcast %18 : vector<16x1xf32> to vector<16x16xf32>
    %20 = arith.mulf %15, %19 : vector<16x16xf32>
    %21 = arith.truncf %20 : vector<16x16xf32> to vector<16x16xbf16>
    %cst_13 = arith.constant dense<0.000000e+00> : vector<16x8xf32>
    %22 = tpu.matmul %21, %9, %cst_13 {dimension_numbers = #tpu.dot_dimension_numbers<[1], [0], [0], [1], [0, 0, 1, 1], [], []>} : vector<16x16xbf16>, vector<16x8xbf16>, vector<16x8xf32> -> vector<16x8xf32>
    %23 = arith.truncf %22 : vector<16x8xf32> to vector<16x8xbf16>
    %c0_14 = arith.constant 0 : index
    %c0_15 = arith.constant 0 : index
    %24 = vector.load %arg7[%c0_14, %c0_15] : memref<16x32xbf16, #tpu.memory_space<vmem>>, vector<16x8xbf16>
    tpu.vector_store %arg7[%c0_14, %c0_15], %23 {strides = array<i32>} : memref<16x32xbf16, #tpu.memory_space<vmem>>, vector<16x8xbf16>,
    %c0_16 = arith.constant 0 : index
    %c8 = arith.constant 8 : index
    %25 = vector.load %arg6[%c0_16, %c8] : memref<16x96xbf16, #tpu.memory_space<vmem>>, vector<16x8xbf16>
    %c0_17 = arith.constant 0 : index
    %c40 = arith.constant 40 : index
    %26 = vector.load %arg6[%c0_17, %c40] : memref<16x96xbf16, #tpu.memory_space<vmem>>, vector<16x8xbf16>
    %c0_18 = arith.constant 0 : index
    %c72 = arith.constant 72 : index
    %27 = vector.load %arg6[%c0_18, %c72] : memref<16x96xbf16, #tpu.memory_space<vmem>>, vector<16x8xbf16>
    %cst_19 = arith.constant dense<0.000000e+00> : vector<16x16xf32>
    %28 = tpu.matmul %25, %26, %cst_19 {dimension_numbers = #tpu.dot_dimension_numbers<[1], [1], [0], [0], [0, 0, 1, 0], [], []>} : vector<16x8xbf16>, vector<16x8xbf16>, vector<16x16xf32> -> vector<16x16xf32>
    %cst_20 = arith.constant dense<0xFF800000> : vector<16xf32>
    %29 = vector.multi_reduction <maximumf>, %28, %cst_20 [1] : vector<16x16xf32> to vector<16xf32>
    %30 = vector.shape_cast %29 : vector<16xf32> to vector<16x1xf32>
    %31 = vector.broadcast %30 : vector<16x1xf32> to vector<16x16xf32>
    %32 = arith.subf %28, %31 : vector<16x16xf32>
    %33 = math.exp %32 : vector<16x16xf32>
    %cst_21 = arith.constant dense<0.000000e+00> : vector<16xf32>
    %34 = vector.multi_reduction <add>, %33, %cst_21 [1] : vector<16x16xf32> to vector<16xf32>
    %35 = vector.shape_cast %34 : vector<16xf32> to vector<16x1xf32>
    %36 = tpu.reciprocal %35 {approx = true} : vector<16x1xf32> -> vector<16x1xf32>
    %37 = vector.broadcast %36 : vector<16x1xf32> to vector<16x16xf32>
    %38 = arith.mulf %33, %37 : vector<16x16xf32>
    %39 = arith.truncf %38 : vector<16x16xf32> to vector<16x16xbf16>
    %cst_22 = arith.constant dense<0.000000e+00> : vector<16x8xf32>
    %40 = tpu.matmul %39, %27, %cst_22 {dimension_numbers = #tpu.dot_dimension_numbers<[1], [0], [0], [1], [0, 0, 1, 1], [], []>} : vector<16x16xbf16>, vector<16x8xbf16>, vector<16x8xf32> -> vector<16x8xf32>
    %41 = arith.truncf %40 : vector<16x8xf32> to vector<16x8xbf16>
    %c0_23 = arith.constant 0 : index
    %c8_24 = arith.constant 8 : index
    %42 = vector.load %arg7[%c0_23, %c8_24] : memref<16x32xbf16, #tpu.memory_space<vmem>>, vector<16x8xbf16>
    tpu.vector_store %arg7[%c0_23, %c8_24], %41 {strides = array<i32>} : memref<16x32xbf16, #tpu.memory_space<vmem>>, vector<16x8xbf16>,
    %c0_25 = arith.constant 0 : index
    %c16 = arith.constant 16 : index
    %43 = vector.load %arg6[%c0_25, %c16] : memref<16x96xbf16, #tpu.memory_space<vmem>>, vector<16x8xbf16>
    %c0_26 = arith.constant 0 : index
    %c48 = arith.constant 48 : index
    %44 = vector.load %arg6[%c0_26, %c48] : memref<16x96xbf16, #tpu.memory_space<vmem>>, vector<16x8xbf16>
    %c0_27 = arith.constant 0 : index
    %c80 = arith.constant 80 : index
    %45 = vector.load %arg6[%c0_27, %c80] : memref<16x96xbf16, #tpu.memory_space<vmem>>, vector<16x8xbf16>
    %cst_28 = arith.constant dense<0.000000e+00> : vector<16x16xf32>
    %46 = tpu.matmul %43, %44, %cst_28 {dimension_numbers = #tpu.dot_dimension_numbers<[1], [1], [0], [0], [0, 0, 1, 0], [], []>} : vector<16x8xbf16>, vector<16x8xbf16>, vector<16x16xf32> -> vector<16x16xf32>
    %cst_29 = arith.constant dense<0xFF800000> : vector<16xf32>
    %47 = vector.multi_reduction <maximumf>, %46, %cst_29 [1] : vector<16x16xf32> to vector<16xf32>
    %48 = vector.shape_cast %47 : vector<16xf32> to vector<16x1xf32>
    %49 = vector.broadcast %48 : vector<16x1xf32> to vector<16x16xf32>
    %50 = arith.subf %46, %49 : vector<16x16xf32>
    %51 = math.exp %50 : vector<16x16xf32>
    %cst_30 = arith.constant dense<0.000000e+00> : vector<16xf32>
    %52 = vector.multi_reduction <add>, %51, %cst_30 [1] : vector<16x16xf32> to vector<16xf32>
    %53 = vector.shape_cast %52 : vector<16xf32> to vector<16x1xf32>
    %54 = tpu.reciprocal %53 {approx = true} : vector<16x1xf32> -> vector<16x1xf32>
    %55 = vector.broadcast %54 : vector<16x1xf32> to vector<16x16xf32>
    %56 = arith.mulf %51, %55 : vector<16x16xf32>
    %57 = arith.truncf %56 : vector<16x16xf32> to vector<16x16xbf16>
    %cst_31 = arith.constant dense<0.000000e+00> : vector<16x8xf32>
    %58 = tpu.matmul %57, %45, %cst_31 {dimension_numbers = #tpu.dot_dimension_numbers<[1], [0], [0], [1], [0, 0, 1, 1], [], []>} : vector<16x16xbf16>, vector<16x8xbf16>, vector<16x8xf32> -> vector<16x8xf32>
    %59 = arith.truncf %58 : vector<16x8xf32> to vector<16x8xbf16>
    %c0_32 = arith.constant 0 : index
    %c16_33 = arith.constant 16 : index
    %60 = vector.load %arg7[%c0_32, %c16_33] : memref<16x32xbf16, #tpu.memory_space<vmem>>, vector<16x8xbf16>
    tpu.vector_store %arg7[%c0_32, %c16_33], %59 {strides = array<i32>} : memref<16x32xbf16, #tpu.memory_space<vmem>>, vector<16x8xbf16>,
    %c0_34 = arith.constant 0 : index
    %c24 = arith.constant 24 : index
    %61 = vector.load %arg6[%c0_34, %c24] : memref<16x96xbf16, #tpu.memory_space<vmem>>, vector<16x8xbf16>
    %c0_35 = arith.constant 0 : index
    %c56 = arith.constant 56 : index
    %62 = vector.load %arg6[%c0_35, %c56] : memref<16x96xbf16, #tpu.memory_space<vmem>>, vector<16x8xbf16>
    %c0_36 = arith.constant 0 : index
    %c88 = arith.constant 88 : index
    %63 = vector.load %arg6[%c0_36, %c88] : memref<16x96xbf16, #tpu.memory_space<vmem>>, vector<16x8xbf16>
    %cst_37 = arith.constant dense<0.000000e+00> : vector<16x16xf32>
    %64 = tpu.matmul %61, %62, %cst_37 {dimension_numbers = #tpu.dot_dimension_numbers<[1], [1], [0], [0], [0, 0, 1, 0], [], []>} : vector<16x8xbf16>, vector<16x8xbf16>, vector<16x16xf32> -> vector<16x16xf32>
    %cst_38 = arith.constant dense<0xFF800000> : vector<16xf32>
    %65 = vector.multi_reduction <maximumf>, %64, %cst_38 [1] : vector<16x16xf32> to vector<16xf32>
    %66 = vector.shape_cast %65 : vector<16xf32> to vector<16x1xf32>
    %67 = vector.broadcast %66 : vector<16x1xf32> to vector<16x16xf32>
    %68 = arith.subf %64, %67 : vector<16x16xf32>
    %69 = math.exp %68 : vector<16x16xf32>
    %cst_39 = arith.constant dense<0.000000e+00> : vector<16xf32>
    %70 = vector.multi_reduction <add>, %69, %cst_39 [1] : vector<16x16xf32> to vector<16xf32>
    %71 = vector.shape_cast %70 : vector<16xf32> to vector<16x1xf32>
    %72 = tpu.reciprocal %71 {approx = true} : vector<16x1xf32> -> vector<16x1xf32>
    %73 = vector.broadcast %72 : vector<16x1xf32> to vector<16x16xf32>
    %74 = arith.mulf %69, %73 : vector<16x16xf32>
    %75 = arith.truncf %74 : vector<16x16xf32> to vector<16x16xbf16>
    %cst_40 = arith.constant dense<0.000000e+00> : vector<16x8xf32>
    %76 = tpu.matmul %75, %63, %cst_40 {dimension_numbers = #tpu.dot_dimension_numbers<[1], [0], [0], [1], [0, 0, 1, 1], [], []>} : vector<16x16xbf16>, vector<16x8xbf16>, vector<16x8xf32> -> vector<16x8xf32>
    %77 = arith.truncf %76 : vector<16x8xf32> to vector<16x8xbf16>
    %c0_41 = arith.constant 0 : index
    %c24_42 = arith.constant 24 : index
    %78 = vector.load %arg7[%c0_41, %c24_42] : memref<16x32xbf16, #tpu.memory_space<vmem>>, vector<16x8xbf16>
    tpu.vector_store %arg7[%c0_41, %c24_42], %77 {strides = array<i32>} : memref<16x32xbf16, #tpu.memory_space<vmem>>, vector<16x8xbf16>,
    %c0_43 = arith.constant 0 : index
    %c0_44 = arith.constant 0 : index
    %79 = vector.load %arg7[%c0_43, %c0_44] : memref<16x32xbf16, #tpu.memory_space<vmem>>, vector<16x32xbf16>
    %c0_45 = arith.constant 0 : index
    %c0_46 = arith.constant 0 : index
    %80 = vector.load %arg3[%c0_45, %c0_46] : memref<32x32xbf16, #tpu.memory_space<vmem>>, vector<32x32xbf16>
    %cst_47 = arith.constant dense<0.000000e+00> : vector<16x32xf32>
    %81 = tpu.matmul %79, %80, %cst_47 {dimension_numbers = #tpu.dot_dimension_numbers<[1], [1], [0], [0], [0, 0, 1, 0], [], []>} : vector<16x32xbf16>, vector<32x32xbf16>, vector<16x32xf32> -> vector<16x32xf32>
    %c0_48 = arith.constant 0 : index
    %c0_49 = arith.constant 0 : index
    %82 = vector.load %arg4[%c0_48, %c0_49] : memref<1x32xf32, #tpu.memory_space<vmem>>, vector<1x32xf32>
    %83 = vector.broadcast %82 : vector<1x32xf32> to vector<16x32xf32>
    %84 = arith.addf %81, %83 : vector<16x32xf32>
    %c0_50 = arith.constant 0 : index
    %c0_51 = arith.constant 0 : index
    %c0_52 = arith.constant 0 : index
    %85 = vector.load %arg5[%c0_50, %c0_51, %c0_52] : memref<1x16x32xf32, #tpu.memory_space<vmem>>, vector<1x16x32xf32>
    %86 = vector.shape_cast %85 : vector<1x16x32xf32> to vector<16x32xf32>
    %87 = vector.shape_cast %84 : vector<16x32xf32> to vector<1x16x32xf32>
    tpu.vector_store %arg5[%c0_50, %c0_51, %c0_52], %87 {strides = array<i32>} : memref<1x16x32xf32, #tpu.memory_space<vmem>>, vector<1x16x32xf32>,
    return
  }
  func.func @transform_0(%arg0: i32) -> (i32, i32, i32) {
    %c0_i32 = arith.constant 0 : i32
    %c0_i32_0 = arith.constant 0 : i32
    %c0_i32_1 = arith.constant 0 : i32
    return %arg0, %c0_i32, %c0_i32_0 : i32, i32, i32
  }
  func.func @transform_1(%arg0: i32) -> (i32, i32) {
    %c0_i32 = arith.constant 0 : i32
    %c0_i32_0 = arith.constant 0 : i32
    %c0_i32_1 = arith.constant 0 : i32
    return %c0_i32, %c0_i32_0 : i32, i32
  }
  func.func @transform_2(%arg0: i32) -> (i32, i32) {
    %c0_i32 = arith.constant 0 : i32
    %c0_i32_0 = arith.constant 0 : i32
    %c0_i32_1 = arith.constant 0 : i32
    return %c0_i32, %c0_i32_0 : i32, i32
  }
  func.func @transform_3(%arg0: i32) -> (i32, i32) {
    %c0_i32 = arith.constant 0 : i32
    %c0_i32_0 = arith.constant 0 : i32
    %c0_i32_1 = arith.constant 0 : i32
    return %c0_i32, %c0_i32_0 : i32, i32
  }
  func.func @transform_4(%arg0: i32) -> (i32, i32, i32) {
    %c0_i32 = arith.constant 0 : i32
    %c0_i32_0 = arith.constant 0 : i32
    %c0_i32_1 = arith.constant 0 : i32
    return %arg0, %c0_i32, %c0_i32_0 : i32, i32, i32
  }
}

</mosaic_0001>

<llo_original>
// kernel: tpu_custom_call.1
$region0: #{tpu_custom_call.1}
  #allocation0 [shape = 'u32[]', space=smem, size = 0x4, offset = 0x4, fixed_abs, tag = 'smem constant byte address 0x4 - core index']
  #allocation1 [shape = 'u32[144,128]{1,0:T(1,128)}', space=vmem, size = 0x12000, scoped, tag = 'internal scratch']
  #allocation2 [shape = 'bf16[16,96]{1,0:T(16,128)(2,1)}', space=vmem, size = 0x1000, scoped, tag = 'scratch operand']
  #allocation3 [shape = 'bf16[16,32]{1,0:T(16,128)(2,1)}', space=vmem, size = 0x1000, scoped, tag = 'scratch operand']
  %s0 = inlined_call_operand.vmem [shape: f32[2,16,32], index: 0, kind: input, shape index: {}]
  %s1 = inlined_call_operand.vmem [shape: bf16[96,32], index: 1, kind: input, shape index: {}]
  %s2 = inlined_call_operand.vmem [shape: bf16[32,32], index: 2, kind: input, shape index: {}]
  %s3 = inlined_call_operand.vmem [shape: f32[1,32], index: 3, kind: input, shape index: {}]
  %s4 = inlined_call_operand.hbm [shape: f32[2,16,32], index: 4, kind: output, shape index: {}]
  %s5 = sld [smem:[#allocation0]]
  $region49: #{tpu_custom_call.1} parent=0
    _
  %s7 = ssub.s32 1, %s5
  %s8 = scalar_select 0, %s7, %s5
  $region1: #{tpu_custom_call.1} parent=0
    #allocation4 [shape = 'u8[16384]{0}', space=vmem, size = 0x4000, scoped, tag = 'output window, operand 0']
    #allocation5 [shape = 's32[2]{0}', space=sflag, size = 0x8, scoped, tag = 'scoped memory for tpu_custom_call.1']
    %9 = vsyncpa [#allocation5], 0
    %s10 = scalar_lea.sflag [#allocation5], 1
    %11 = vsyncpa %s10, 0
    loop: start=0, step=1, limit=4
    $region2: #{tpu_custom_call.1} parent=1 // loop_pre_header
      _
    $region3: #{tpu_custom_call.1} parent=1 // loop_header
      %s13 = sphi 0, %s17
      %p14 = scmp.ge.s32.totalorder %s13, 4
      %s23 = sphi 0, %s25
      %s26 = sphi 0, %s23
      %s27 = sphi 0, %s26
      %s43 = sphi 0, %s27
      %s47 = sphi 0, %s47
      %s49 = sphi 0, %s47
      %s50 = sphi 0, %s49
      %s64 = sphi 0, %s50
      %s68 = sphi 0, %s68
      %s70 = sphi 0, %s68
      %s71 = sphi 0, %s70
      %s85 = sphi 0, %s71
      %s89 = sphi 0, %s89
      %s91 = sphi 0, %s89
      %s92 = sphi 0, %s91
      %s106 = sphi 0, %s92
      %s112 = sphi 0, %s114
      %s115 = sphi 0, %s112
      %s116 = sphi 0, %s115
      %s132 = sphi 0, %s116
    $region4: #{tpu_custom_call.1} parent=1 // loop_header_branch
      %16 = sbr.rel (%p14) target = $region8
    $region5: #{tpu_custom_call.1} parent=1 // loop_body
      %s18 = ssub.s32 %s13, 1
      %s19 = ssub.s32 %s13, 2
      %s20 = sadd.s32 %s13, 1
      %s21 = ssub.s32 %s13, %s20
      %p22 = scmp.eq.s32.totalorder %s21, 0
      %s24 = sadd.s32 %s23, 1
      %s25 = scalar_select %p22, %s23, %s24
      %p28 = pneg %p22
      %p29 = scmp.eq.s32.totalorder %s13, 1
      %p30 = por %p28, %p29
      %p31 = scmp.ne.s32.totalorder %s23, %s26
      %p32 = scmp.eq.s32.totalorder %s13, 0
      %p33 = por %p31, %p32
      %p34 = scmp.ne.s32.totalorder %s23, %s26
      %p35 = scmp.eq.s32.totalorder %s18, 1
      %p36 = por %p34, %p35
      %p37 = scmp.ne.s32.totalorder %s26, %s27
      %p38 = scmp.eq.s32.totalorder %s18, 0
      %p39 = por %p37, %p38
      %p40 = scmp.ne.s32.totalorder %s26, %s27
      %p41 = scmp.eq.s32.totalorder %s19, 1
      %p42 = por %p40, %p41
      %p44 = scmp.ne.s32.totalorder %s27, %s43
      %p45 = scmp.eq.s32.totalorder %s19, 0
      %p46 = por %p44, %p45
      %s48 = sadd.s32 %s47, 1
      %p51 = scmp.eq.s32.totalorder %s13, 1
      %p52 = scmp.ne.s32.totalorder %s47, %s49
      %p53 = scmp.eq.s32.totalorder %s13, 0
      %p54 = por %p52, %p53
      %p55 = scmp.ne.s32.totalorder %s47, %s49
      %p56 = scmp.eq.s32.totalorder %s18, 1
      %p57 = por %p55, %p56
      %p58 = scmp.ne.s32.totalorder %s49, %s50
      %p59 = scmp.eq.s32.totalorder %s18, 0
      %p60 = por %p58, %p59
      %p61 = scmp.ne.s32.totalorder %s49, %s50
      %p62 = scmp.eq.s32.totalorder %s19, 1
      %p63 = por %p61, %p62
      %p65 = scmp.ne.s32.totalorder %s50, %s64
      %p66 = scmp.eq.s32.totalorder %s19, 0
      %p67 = por %p65, %p66
      %s69 = sadd.s32 %s68, 1
      %p72 = scmp.eq.s32.totalorder %s13, 1
      %p73 = scmp.ne.s32.totalorder %s68, %s70
      %p74 = scmp.eq.s32.totalorder %s13, 0
      %p75 = por %p73, %p74
      %p76 = scmp.ne.s32.totalorder %s68, %s70
      %p77 = scmp.eq.s32.totalorder %s18, 1
      %p78 = por %p76, %p77
      %p79 = scmp.ne.s32.totalorder %s70, %s71
      %p80 = scmp.eq.s32.totalorder %s18, 0
      %p81 = por %p79, %p80
      %p82 = scmp.ne.s32.totalorder %s70, %s71
      %p83 = scmp.eq.s32.totalorder %s19, 1
      %p84 = por %p82, %p83
      %p86 = scmp.ne.s32.totalorder %s71, %s85
      %p87 = scmp.eq.s32.totalorder %s19, 0
      %p88 = por %p86, %p87
      %s90 = sadd.s32 %s89, 1
      %p93 = scmp.eq.s32.totalorder %s13, 1
      %p94 = scmp.ne.s32.totalorder %s89, %s91
      %p95 = scmp.eq.s32.totalorder %s13, 0
      %p96 = por %p94, %p95
      %p97 = scmp.ne.s32.totalorder %s89, %s91
      %p98 = scmp.eq.s32.totalorder %s18, 1
      %p99 = por %p97, %p98
      %p100 = scmp.ne.s32.totalorder %s91, %s92
      %p101 = scmp.eq.s32.totalorder %s18, 0
      %p102 = por %p100, %p101
      %p103 = scmp.ne.s32.totalorder %s91, %s92
      %p104 = scmp.eq.s32.totalorder %s19, 1
      %p105 = por %p103, %p104
      %p107 = scmp.ne.s32.totalorder %s92, %s106
      %p108 = scmp.eq.s32.totalorder %s19, 0
      %p109 = por %p107, %p108
      %s110 = ssub.s32 %s13, %s20
      %p111 = scmp.eq.s32.totalorder %s110, 0
      %s113 = sadd.s32 %s112, 1
      %s114 = scalar_select %p111, %s112, %s113
      %p117 = pneg %p111
      %p118 = scmp.eq.s32.totalorder %s13, 1
      %p119 = por %p117, %p118
      %p120 = scmp.ne.s32.totalorder %s112, %s115
      %p121 = scmp.eq.s32.totalorder %s13, 0
      %p122 = por %p120, %p121
      %p123 = scmp.ne.s32.totalorder %s112, %s115
      %p124 = scmp.eq.s32.totalorder %s18, 1
      %p125 = por %p123, %p124
      %p126 = scmp.ne.s32.totalorder %s115, %s116
      %p127 = scmp.eq.s32.totalorder %s18, 0
      %p128 = por %p126, %p127
      %p129 = scmp.ne.s32.totalorder %s115, %s116
      %p130 = scmp.eq.s32.totalorder %s19, 1
      %p131 = por %p129, %p130
      %p133 = scmp.ne.s32.totalorder %s116, %s132
      %p134 = scmp.eq.s32.totalorder %s19, 0
      %p135 = por %p133, %p134
      %p136 = scmp.le.s32.totalorder 1, %s13
      %p137 = scmp.lt.s32.totalorder %s13, 3
      %p138 = pnand %p136, %p137
      %p139 = pneg %p138
      // Predicated region
      $region9: #{tpu_custom_call.1} parent=5 // pred_check
        _
      $region10: #{tpu_custom_call.1} parent=5 // pred_check_branch
        %141 = sbr.rel (%p138) target = $region12
      $region11: #{tpu_custom_call.1} parent=5 // pred_region
        %s142 = ssub.s32 %s13, 1
        // Predicated region
        $region13: #{tpu_custom_call.1} parent=11 // pred_check
          %p143 = pneg %p60
        $region14: #{tpu_custom_call.1} parent=11 // pred_check_branch
          %145 = sbr.rel (%p143) target = $region16
        $region15: #{tpu_custom_call.1} parent=11 // pred_region
          _
        $region16: #{tpu_custom_call.1} parent=11 // pred_fallthru
          _
        // Predicated region
        $region17: #{tpu_custom_call.1} parent=11 // pred_check
          %p146 = pneg %p81
        $region18: #{tpu_custom_call.1} parent=11 // pred_check_branch
          %148 = sbr.rel (%p146) target = $region20
        $region19: #{tpu_custom_call.1} parent=11 // pred_region
          _
        $region20: #{tpu_custom_call.1} parent=11 // pred_fallthru
          _
        // Predicated region
        $region21: #{tpu_custom_call.1} parent=11 // pred_check
          %p149 = pneg %p102
        $region22: #{tpu_custom_call.1} parent=11 // pred_check_branch
          %151 = sbr.rel (%p149) target = $region24
        $region23: #{tpu_custom_call.1} parent=11 // pred_region
          _
        $region24: #{tpu_custom_call.1} parent=11 // pred_fallthru
          _
      $region12: #{tpu_custom_call.1} parent=5 // pred_fallthru
        _
      %p152 = scmp.lt.s32.totalorder %s13, 2
      // Predicated region
      $region25: #{tpu_custom_call.1} parent=5 // pred_check
        %p153 = pneg %p152
      $region26: #{tpu_custom_call.1} parent=5 // pred_check_branch
        %155 = sbr.rel (%p153) target = $region28
      $region27: #{tpu_custom_call.1} parent=5 // pred_region
        // Predicated region
        $region29: #{tpu_custom_call.1} parent=27 // pred_check
          %p156 = pneg %p33
        $region30: #{tpu_custom_call.1} parent=27 // pred_check_branch
          %158 = sbr.rel (%p156) target = $region32
        $region31: #{tpu_custom_call.1} parent=27 // pred_region
          %p159 = scmp.lt.s32.totalorder %s13, 1
          %s160 = scalar_select %p159, %s13, 1
          %s161 = smul.addr %s160, 2
          %s162 = smul.addr %s161, 8
          %s163 = scalar_lea.vmem %s0, %s162
        $region32: #{tpu_custom_call.1} parent=27 // pred_fallthru
          _
      $region28: #{tpu_custom_call.1} parent=5 // pred_fallthru
        _
      %p164 = scmp.le.s32.totalorder 1, %s13
      %p165 = scmp.lt.s32.totalorder %s13, 3
      %p166 = pnand %p164, %p165
      %p167 = pneg %p166
      // Predicated region
      $region33: #{tpu_custom_call.1} parent=5 // pred_check
        _
      $region34: #{tpu_custom_call.1} parent=5 // pred_check_branch
        %169 = sbr.rel (%p166) target = $region36
      $region35: #{tpu_custom_call.1} parent=5 // pred_region
        %s170 = ssub.s32 %s13, 1
        %p171 = scmp.lt.s32.totalorder %s18, 1
        %s172 = scalar_select %p171, %s18, 1
        %s173 = smul.addr %s172, 2
        %s174 = smul.addr %s173, 8
        %s175 = scalar_lea.vmem %s0, %s174
        %p176 = pneg %p39
        %p177 = pneg %p36
        %p178 = pneg %p60
        %p179 = pneg %p57
        %p180 = pneg %p81
        %p181 = pneg %p78
        %p182 = pneg %p102
        %p183 = pneg %p99
        %p184 = pneg %p128
        %p185 = pneg %p125
        %s186 = sand.u32 %s115, 1
        %s187 = scalar_lea.sflag [#allocation5], %s186
        %s188 = sand.u32 %s115, 1
        %s189 = smul.addr %s188, 16
        %s190 = scalar_lea.vmem [#allocation4], %s189
        %p191 = scmp.lt.s32.totalorder %s18, 1
        %s192 = scalar_select %p191, %s18, 1
        %s193 = smul.addr %s192, 2
        %s194 = smul.addr %s193, 8
        %s195 = scalar_lea.vmem %s0, %s194
        %v197 = vld [vmem:[%s195] sm:$0xff]
        %v198 = vld [vmem:[%s195 + $0x8] sm:$0xff]
        %v199 = vpack.c.bf16 %v198, %v197
        %v200 = vld [vmem:[%s1] sm:$0xf]
        %v201 = vld [vmem:[%s1 + $0x4] sm:$0xf]
        %v202 = vld [vmem:[%s1 + $0x8] sm:$0xf]
        %v203 = vld [vmem:[%s1 + $0xc] sm:$0xf]
        %v204 = vld [vmem:[%s1 + $0x10] sm:$0xf]
        %v205 = vld [vmem:[%s1 + $0x14] sm:$0xf]
        %v206 = vld [vmem:[%s1 + $0x18] sm:$0xf]
        %v207 = vld [vmem:[%s1 + $0x1c] sm:$0xf]
        %v208 = vld [vmem:[%s1 + $0x20] sm:$0xf]
        %v209 = vld [vmem:[%s1 + $0x24] sm:$0xf]
        %v210 = vld [vmem:[%s1 + $0x28] sm:$0xf]
        %v211 = vld [vmem:[%s1 + $0x2c] sm:$0xf]
        %v224 = vunpack.c.l.b16 %v200
        %v225 = vunpack.c.l.b16 %v201
        %v226 = vunpack.c.l.b16 %v202
        %v227 = vunpack.c.l.b16 %v203
        %v228 = vunpack.c.l.b16 %v204
        %v229 = vunpack.c.l.b16 %v205
        %v230 = vunpack.c.l.b16 %v206
        %v231 = vunpack.c.l.b16 %v207
        %v232 = vunpack.c.l.b16 %v208
        %v233 = vunpack.c.l.b16 %v209
        %v234 = vunpack.c.l.b16 %v210
        %v235 = vunpack.c.l.b16 %v211
        %v236 = vpack.c.b16 %v225, %v224
        %v237 = vpack.c.b16 %v227, %v226
        %v238 = vpack.c.b16 %v229, %v228
        %v239 = vpack.c.b16 %v231, %v230
        %v240 = vpack.c.b16 %v233, %v232
        %v241 = vpack.c.b16 %v235, %v234
        %vm242 = vcmask 261120
        %v244 = vsel %vm242, %v199, 0
        %v247 = vsel %vm242, %v236, 0
        %v250 = vsel %vm242, %v237, 0
        %v253 = vsel %vm242, %v238, 0
        %v256 = vsel %vm242, %v239, 0
        %v259 = vsel %vm242, %v240, 0
        %v262 = vsel %vm242, %v241, 0
        %264 = vmatprep.subr.bf16.mxu0 0
        %265 = vmatpush1.bf16.xpose.msra.mxu0 %v247
        %266 = vmatprep.subr.bf16.mxu0 0
        %267 = vmatpush1.bf16.xpose.msra.mxu0 %v250
        %268 = vmatprep.subr.bf16.mxu0 0
        %269 = vmatpush1.bf16.xpose.msra.mxu0 %v253
        %270 = vmatprep.subr.bf16.mxu0 0
        %271 = vmatpush1.bf16.xpose.msra.mxu0 %v256
        %272 = vmatprep.subr.bf16.mxu0 0
        %273 = vmatpush1.bf16.xpose.msra.mxu0 %v259
        %274 = vmatprep.subr.bf16.mxu0 0
        %275 = vmatpush1.bf16.xpose.msra.mxu0 %v262
        %276 = vmatprep.subr.bf16.mxu0 0
        %277 = vmatpush1.bf16.xpose.msra.mxu0 0
        %278 = vmatprep.subr.bf16.mxu0 0
        %279 = vmatpush1.bf16.xpose.msra.mxu0 0
        %280 = vmatprep.subr.bf16.mxu0 0
        %281 = vmatpush1.bf16.xpose.msra.mxu0 0
        %282 = vmatprep.subr.bf16.mxu0 0
        %283 = vmatpush1.bf16.xpose.msra.mxu0 0
        %284 = vmatprep.subr.bf16.mxu0 0
        %285 = vmatpush1.bf16.xpose.msra.mxu0 0
        %286 = vmatprep.subr.bf16.mxu0 0
        %287 = vmatpush1.bf16.xpose.msra.mxu0 0
        %288 = vmatprep.subr.bf16.mxu0 0
        %289 = vmatpush1.bf16.xpose.msra.mxu0 0
        %290 = vmatprep.subr.bf16.mxu0 0
        %291 = vmatpush1.bf16.xpose.msra.mxu0 0
        %292 = vmatprep.subr.bf16.mxu0 0
        %293 = vmatpush1.bf16.xpose.msra.mxu0 0
        %294 = vmatprep.subr.bf16.mxu0 0
        %295 = vmatpush1.bf16.xpose.msra.mxu0 0
        %296 = vmatprep.mubr.bf16.mxu0 0
        %297 = vmatmul.mubr.bf16.gmra.mrb[0].mxu0 %v244
        %v298 = vpop.f32.mrb[0].mxu0
        %v299 = vadd.f32 0.0, %v298
        %v300 = vpop.f32.mrb[0].mxu0
        %v301 = vpop.f32.mrb[0].mxu0
        %v302 = vadd.f32 0.0, %v301
        %v303 = vpop.f32.mrb[0].mxu0
        %304 = vdwg.mxu0
        %v305 = vpack.c.bf16 %v302, %v299
        %vm306 = vcmask 785408
        %307 = vst.msk [vmem:[#allocation2] sm:$0xff] %vm306, %v305
        %v308 = vld [vmem:[#allocation2] sm:$0xff]
        %310 = vrot.lane.b32.xlu0 %v308, 96
        %v311 = vpop.permute.xlu0 %310
        %vm312 = vcmask 64512
        %v314 = vsel %vm312, %v308, 0
        %v317 = vsel %vm312, %v311, 0
        %319 = vmatprep.subr.bf16.mxu0 0
        %320 = vmatpush1.bf16.xpose.msra.mxu0 %v317
        %321 = vmatprep.subr.bf16.mxu0 0
        %322 = vmatpush1.bf16.xpose.msra.mxu0 0
        %323 = vmatprep.subr.bf16.mxu0 0
        %324 = vmatpush1.bf16.xpose.msra.mxu0 0
        %325 = vmatprep.subr.bf16.mxu0 0
        %326 = vmatpush1.bf16.xpose.msra.mxu0 0
        %327 = vmatprep.subr.bf16.mxu0 0
        %328 = vmatpush1.bf16.xpose.msra.mxu0 0
        %329 = vmatprep.subr.bf16.mxu0 0
        %330 = vmatpush1.bf16.xpose.msra.mxu0 0
        %331 = vmatprep.subr.bf16.mxu0 0
        %332 = vmatpush1.bf16.xpose.msra.mxu0 0
        %333 = vmatprep.subr.bf16.mxu0 0
        %334 = vmatpush1.bf16.xpose.msra.mxu0 0
        %335 = vmatprep.subr.bf16.mxu0 0
        %336 = vmatpush1.bf16.xpose.msra.mxu0 0
        %337 = vmatprep.subr.bf16.mxu0 0
        %338 = vmatpush1.bf16.xpose.msra.mxu0 0
        %339 = vmatprep.subr.bf16.mxu0 0
        %340 = vmatpush1.bf16.xpose.msra.mxu0 0
        %341 = vmatprep.subr.bf16.mxu0 0
        %342 = vmatpush1.bf16.xpose.msra.mxu0 0
        %343 = vmatprep.subr.bf16.mxu0 0
        %344 = vmatpush1.bf16.xpose.msra.mxu0 0
        %345 = vmatprep.subr.bf16.mxu0 0
        %346 = vmatpush1.bf16.xpose.msra.mxu0 0
        %347 = vmatprep.subr.bf16.mxu0 0
        %348 = vmatpush1.bf16.xpose.msra.mxu0 0
        %349 = vmatprep.subr.bf16.mxu0 0
        %350 = vmatpush1.bf16.xpose.msra.mxu0 0
        %351 = vmatprep.mubr.bf16.mxu0 0
        %352 = vmatmul.mubr.bf16.gmra.mrb[0].mxu0 %v314
        %v353 = vpop.f32.mrb[0].mxu0
        %v354 = vadd.f32 0.0, %v353
        %v355 = vpop.f32.mrb[0].mxu0
        %v356 = vpop.f32.mrb[0].mxu0
        %v357 = vadd.f32 0.0, %v356
        %v358 = vpop.f32.mrb[0].mxu0
        %359 = vdwg.mxu0
        %vm360 = vcmask 130048
        %v361 = vsel %vm360, %v354, -inf
        %362 = vmax.xlane.f32.xlu0 %v361
        %v363 = vpop.xlane.xlu0 %362
        %v364 = vsel %vm360, %v357, -inf
        %365 = vmax.xlane.f32.xlu0 %v364
        %v366 = vpop.xlane.xlu0 %365
        %v367 = vsub.f32 %v354, %v363
        %v368 = vsub.f32 %v357, %v366
        %v369 = vmul.f32 %v367, 1.442695
        %v370 = vpow.pop %v369
        %v371 = vmul.f32 %v368, 1.442695
        %v372 = vpow.pop %v371
        %v373 = vsel %vm360, %v370, 0.0
        %374 = vadd.xlane.f32.xlu0 %v373
        %v375 = vpop.xlane.xlu0 %374
        %v376 = vsel %vm360, %v372, 0.0
        %377 = vadd.xlane.f32.xlu0 %v376
        %v378 = vpop.xlane.xlu0 %377
        %v379 = vrcp.pop %v375
        %v380 = vrcp.pop %v378
        %v381 = vmul.f32 %v370, %v379
        %v382 = vmul.f32 %v372, %v380
        %v383 = vpack.c.bf16 %v382, %v381
        %384 = vrot.lane.b32.xlu0 %v308, 64
        %v385 = vpop.permute.xlu0 %384
        %v388 = vsel %vm360, %v383, 0
        %390 = vmatprep.subr.bf16.mxu0 0
        %391 = vmatpush1.bf16.msra.mxu0 %v385
        %392 = vmatprep.subr.bf16.mxu0 0
        %393 = vmatpush1.bf16.msra.mxu0 0
        %394 = vmatprep.subr.bf16.mxu0 0
        %395 = vmatpush1.bf16.msra.mxu0 0
        %396 = vmatprep.subr.bf16.mxu0 0
        %397 = vmatpush1.bf16.msra.mxu0 0
        %398 = vmatprep.subr.bf16.mxu0 0
        %399 = vmatpush1.bf16.msra.mxu0 0
        %400 = vmatprep.subr.bf16.mxu0 0
        %401 = vmatpush1.bf16.msra.mxu0 0
        %402 = vmatprep.subr.bf16.mxu0 0
        %403 = vmatpush1.bf16.msra.mxu0 0
        %404 = vmatprep.subr.bf16.mxu0 0
        %405 = vmatpush1.bf16.msra.mxu0 0
        %406 = vmatprep.subr.bf16.mxu0 0
        %407 = vmatpush1.bf16.msra.mxu0 0
        %408 = vmatprep.subr.bf16.mxu0 0
        %409 = vmatpush1.bf16.msra.mxu0 0
        %410 = vmatprep.subr.bf16.mxu0 0
        %411 = vmatpush1.bf16.msra.mxu0 0
        %412 = vmatprep.subr.bf16.mxu0 0
        %413 = vmatpush1.bf16.msra.mxu0 0
        %414 = vmatprep.subr.bf16.mxu0 0
        %415 = vmatpush1.bf16.msra.mxu0 0
        %416 = vmatprep.subr.bf16.mxu0 0
        %417 = vmatpush1.bf16.msra.mxu0 0
        %418 = vmatprep.subr.bf16.mxu0 0
        %419 = vmatpush1.bf16.msra.mxu0 0
        %420 = vmatprep.subr.bf16.mxu0 0
        %421 = vmatpush1.bf16.msra.mxu0 0
        %422 = vmatprep.mubr.bf16.mxu0 0
        %423 = vmatmul.mubr.bf16.gmra.mrb[0].mxu0 %v388
        %v424 = vpop.f32.mrb[0].mxu0
        %v425 = vadd.f32 0.0, %v424
        %v426 = vpop.f32.mrb[0].mxu0
        %v427 = vpop.f32.mrb[0].mxu0
        %v428 = vadd.f32 0.0, %v427
        %v429 = vpop.f32.mrb[0].mxu0
        %430 = vdwg.mxu0
        %v431 = vpack.c.bf16 %v428, %v425
        %432 = vst.msk [vmem:[#allocation3] sm:$0xff] %vm312, %v431
        %v433 = vld [vmem:[#allocation2] sm:$0xff]
        %435 = vrot.lane.b32.xlu0 %v433, 120
        %v436 = vpop.permute.xlu0 %435
        %437 = vrot.lane.b32.xlu0 %v433, 88
        %v438 = vpop.permute.xlu0 %437
        %v440 = vsel %vm312, %v436, 0
        %v443 = vsel %vm312, %v438, 0
        %445 = vmatprep.subr.bf16.mxu0 0
        %446 = vmatpush1.bf16.xpose.msra.mxu0 %v443
        %447 = vmatprep.subr.bf16.mxu0 0
        %448 = vmatpush1.bf16.xpose.msra.mxu0 0
        %449 = vmatprep.subr.bf16.mxu0 0
        %450 = vmatpush1.bf16.xpose.msra.mxu0 0
        %451 = vmatprep.subr.bf16.mxu0 0
        %452 = vmatpush1.bf16.xpose.msra.mxu0 0
        %453 = vmatprep.subr.bf16.mxu0 0
        %454 = vmatpush1.bf16.xpose.msra.mxu0 0
        %455 = vmatprep.subr.bf16.mxu0 0
        %456 = vmatpush1.bf16.xpose.msra.mxu0 0
        %457 = vmatprep.subr.bf16.mxu0 0
        %458 = vmatpush1.bf16.xpose.msra.mxu0 0
        %459 = vmatprep.subr.bf16.mxu0 0
        %460 = vmatpush1.bf16.xpose.msra.mxu0 0
        %461 = vmatprep.subr.bf16.mxu0 0
        %462 = vmatpush1.bf16.xpose.msra.mxu0 0
        %463 = vmatprep.subr.bf16.mxu0 0
        %464 = vmatpush1.bf16.xpose.msra.mxu0 0
        %465 = vmatprep.subr.bf16.mxu0 0
        %466 = vmatpush1.bf16.xpose.msra.mxu0 0
        %467 = vmatprep.subr.bf16.mxu0 0
        %468 = vmatpush1.bf16.xpose.msra.mxu0 0
        %469 = vmatprep.subr.bf16.mxu0 0
        %470 = vmatpush1.bf16.xpose.msra.mxu0 0
        %471 = vmatprep.subr.bf16.mxu0 0
        %472 = vmatpush1.bf16.xpose.msra.mxu0 0
        %473 = vmatprep.subr.bf16.mxu0 0
        %474 = vmatpush1.bf16.xpose.msra.mxu0 0
        %475 = vmatprep.subr.bf16.mxu0 0
        %476 = vmatpush1.bf16.xpose.msra.mxu0 0
        %477 = vmatprep.mubr.bf16.mxu0 0
        %478 = vmatmul.mubr.bf16.gmra.mrb[0].mxu0 %v440
        %v479 = vpop.f32.mrb[0].mxu0
        %v480 = vadd.f32 0.0, %v479
        %v481 = vpop.f32.mrb[0].mxu0
        %v482 = vpop.f32.mrb[0].mxu0
        %v483 = vadd.f32 0.0, %v482
        %v484 = vpop.f32.mrb[0].mxu0
        %485 = vdwg.mxu0
        %v486 = vsel %vm360, %v480, -inf
        %487 = vmax.xlane.f32.xlu0 %v486
        %v488 = vpop.xlane.xlu0 %487
        %v489 = vsel %vm360, %v483, -inf
        %490 = vmax.xlane.f32.xlu0 %v489
        %v491 = vpop.xlane.xlu0 %490
        %v492 = vsub.f32 %v480, %v488
        %v493 = vsub.f32 %v483, %v491
        %v494 = vmul.f32 %v492, 1.442695
        %v495 = vpow.pop %v494
        %v496 = vmul.f32 %v493, 1.442695
        %v497 = vpow.pop %v496
        %v498 = vsel %vm360, %v495, 0.0
        %499 = vadd.xlane.f32.xlu0 %v498
        %v500 = vpop.xlane.xlu0 %499
        %v501 = vsel %vm360, %v497, 0.0
        %502 = vadd.xlane.f32.xlu0 %v501
        %v503 = vpop.xlane.xlu0 %502
        %v504 = vrcp.pop %v500
        %v505 = vrcp.pop %v503
        %v506 = vmul.f32 %v495, %v504
        %v507 = vmul.f32 %v497, %v505
        %v508 = vpack.c.bf16 %v507, %v506
        %509 = vrot.lane.b32.xlu0 %v433, 56
        %v510 = vpop.permute.xlu0 %509
        %v513 = vsel %vm360, %v508, 0
        %515 = vmatprep.subr.bf16.mxu0 0
        %516 = vmatpush1.bf16.msra.mxu0 %v510
        %517 = vmatprep.subr.bf16.mxu0 0
        %518 = vmatpush1.bf16.msra.mxu0 0
        %519 = vmatprep.subr.bf16.mxu0 0
        %520 = vmatpush1.bf16.msra.mxu0 0
        %521 = vmatprep.subr.bf16.mxu0 0
        %522 = vmatpush1.bf16.msra.mxu0 0
        %523 = vmatprep.subr.bf16.mxu0 0
        %524 = vmatpush1.bf16.msra.mxu0 0
        %525 = vmatprep.subr.bf16.mxu0 0
        %526 = vmatpush1.bf16.msra.mxu0 0
        %527 = vmatprep.subr.bf16.mxu0 0
        %528 = vmatpush1.bf16.msra.mxu0 0
        %529 = vmatprep.subr.bf16.mxu0 0
        %530 = vmatpush1.bf16.msra.mxu0 0
        %531 = vmatprep.subr.bf16.mxu0 0
        %532 = vmatpush1.bf16.msra.mxu0 0
        %533 = vmatprep.subr.bf16.mxu0 0
        %534 = vmatpush1.bf16.msra.mxu0 0
        %535 = vmatprep.subr.bf16.mxu0 0
        %536 = vmatpush1.bf16.msra.mxu0 0
        %537 = vmatprep.subr.bf16.mxu0 0
        %538 = vmatpush1.bf16.msra.mxu0 0
        %539 = vmatprep.subr.bf16.mxu0 0
        %540 = vmatpush1.bf16.msra.mxu0 0
        %541 = vmatprep.subr.bf16.mxu0 0
        %542 = vmatpush1.bf16.msra.mxu0 0
        %543 = vmatprep.subr.bf16.mxu0 0
        %544 = vmatpush1.bf16.msra.mxu0 0
        %545 = vmatprep.subr.bf16.mxu0 0
        %546 = vmatpush1.bf16.msra.mxu0 0
        %547 = vmatprep.mubr.bf16.mxu0 0
        %548 = vmatmul.mubr.bf16.gmra.mrb[0].mxu0 %v513
        %v549 = vpop.f32.mrb[0].mxu0
        %v550 = vadd.f32 0.0, %v549
        %v551 = vpop.f32.mrb[0].mxu0
        %v552 = vpop.f32.mrb[0].mxu0
        %v553 = vadd.f32 0.0, %v552
        %v554 = vpop.f32.mrb[0].mxu0
        %555 = vdwg.mxu0
        %v556 = vpack.c.bf16 %v553, %v550
        %558 = vrot.lane.b32.xlu0 %v556, 8
        %v559 = vpop.permute.xlu0 %558
        %vm561 = vcmask 130112
        %562 = vst.msk [vmem:[#allocation3] sm:$0xff] %vm561, %v559
        %v563 = vld [vmem:[#allocation2] sm:$0xff]
        %565 = vrot.lane.b32.xlu0 %v563, 112
        %v566 = vpop.permute.xlu0 %565
        %567 = vrot.lane.b32.xlu0 %v563, 80
        %v568 = vpop.permute.xlu0 %567
        %v570 = vsel %vm312, %v566, 0
        %v573 = vsel %vm312, %v568, 0
        %575 = vmatprep.subr.bf16.mxu0 0
        %576 = vmatpush1.bf16.xpose.msra.mxu0 %v573
        %577 = vmatprep.subr.bf16.mxu0 0
        %578 = vmatpush1.bf16.xpose.msra.mxu0 0
        %579 = vmatprep.subr.bf16.mxu0 0
        %580 = vmatpush1.bf16.xpose.msra.mxu0 0
        %581 = vmatprep.subr.bf16.mxu0 0
        %582 = vmatpush1.bf16.xpose.msra.mxu0 0
        %583 = vmatprep.subr.bf16.mxu0 0
        %584 = vmatpush1.bf16.xpose.msra.mxu0 0
        %585 = vmatprep.subr.bf16.mxu0 0
        %586 = vmatpush1.bf16.xpose.msra.mxu0 0
        %587 = vmatprep.subr.bf16.mxu0 0
        %588 = vmatpush1.bf16.xpose.msra.mxu0 0
        %589 = vmatprep.subr.bf16.mxu0 0
        %590 = vmatpush1.bf16.xpose.msra.mxu0 0
        %591 = vmatprep.subr.bf16.mxu0 0
        %592 = vmatpush1.bf16.xpose.msra.mxu0 0
        %593 = vmatprep.subr.bf16.mxu0 0
        %594 = vmatpush1.bf16.xpose.msra.mxu0 0
        %595 = vmatprep.subr.bf16.mxu0 0
        %596 = vmatpush1.bf16.xpose.msra.mxu0 0
        %597 = vmatprep.subr.bf16.mxu0 0
        %598 = vmatpush1.bf16.xpose.msra.mxu0 0
        %599 = vmatprep.subr.bf16.mxu0 0
        %600 = vmatpush1.bf16.xpose.msra.mxu0 0
        %601 = vmatprep.subr.bf16.mxu0 0
        %602 = vmatpush1.bf16.xpose.msra.mxu0 0
        %603 = vmatprep.subr.bf16.mxu0 0
        %604 = vmatpush1.bf16.xpose.msra.mxu0 0
        %605 = vmatprep.subr.bf16.mxu0 0
        %606 = vmatpush1.bf16.xpose.msra.mxu0 0
        %607 = vmatprep.mubr.bf16.mxu0 0
        %608 = vmatmul.mubr.bf16.gmra.mrb[0].mxu0 %v570
        %v609 = vpop.f32.mrb[0].mxu0
        %v610 = vadd.f32 0.0, %v609
        %v611 = vpop.f32.mrb[0].mxu0
        %v612 = vpop.f32.mrb[0].mxu0
        %v613 = vadd.f32 0.0, %v612
        %v614 = vpop.f32.mrb[0].mxu0
        %615 = vdwg.mxu0
        %v616 = vsel %vm360, %v610, -inf
        %617 = vmax.xlane.f32.xlu0 %v616
        %v618 = vpop.xlane.xlu0 %617
        %v619 = vsel %vm360, %v613, -inf
        %620 = vmax.xlane.f32.xlu0 %v619
        %v621 = vpop.xlane.xlu0 %620
        %v622 = vsub.f32 %v610, %v618
        %v623 = vsub.f32 %v613, %v621
        %v624 = vmul.f32 %v622, 1.442695
        %v625 = vpow.pop %v624
        %v626 = vmul.f32 %v623, 1.442695
        %v627 = vpow.pop %v626
        %v628 = vsel %vm360, %v625, 0.0
        %629 = vadd.xlane.f32.xlu0 %v628
        %v630 = vpop.xlane.xlu0 %629
        %v631 = vsel %vm360, %v627, 0.0
        %632 = vadd.xlane.f32.xlu0 %v631
        %v633 = vpop.xlane.xlu0 %632
        %v634 = vrcp.pop %v630
        %v635 = vrcp.pop %v633
        %v636 = vmul.f32 %v625, %v634
        %v637 = vmul.f32 %v627, %v635
        %v638 = vpack.c.bf16 %v637, %v636
        %639 = vrot.lane.b32.xlu0 %v563, 48
        %v640 = vpop.permute.xlu0 %639
        %v643 = vsel %vm360, %v638, 0
        %645 = vmatprep.subr.bf16.mxu0 0
        %646 = vmatpush1.bf16.msra.mxu0 %v640
        %647 = vmatprep.subr.bf16.mxu0 0
        %648 = vmatpush1.bf16.msra.mxu0 0
        %649 = vmatprep.subr.bf16.mxu0 0
        %650 = vmatpush1.bf16.msra.mxu0 0
        %651 = vmatprep.subr.bf16.mxu0 0
        %652 = vmatpush1.bf16.msra.mxu0 0
        %653 = vmatprep.subr.bf16.mxu0 0
        %654 = vmatpush1.bf16.msra.mxu0 0
        %655 = vmatprep.subr.bf16.mxu0 0
        %656 = vmatpush1.bf16.msra.mxu0 0
        %657 = vmatprep.subr.bf16.mxu0 0
        %658 = vmatpush1.bf16.msra.mxu0 0
        %659 = vmatprep.subr.bf16.mxu0 0
        %660 = vmatpush1.bf16.msra.mxu0 0
        %661 = vmatprep.subr.bf16.mxu0 0
        %662 = vmatpush1.bf16.msra.mxu0 0
        %663 = vmatprep.subr.bf16.mxu0 0
        %664 = vmatpush1.bf16.msra.mxu0 0
        %665 = vmatprep.subr.bf16.mxu0 0
        %666 = vmatpush1.bf16.msra.mxu0 0
        %667 = vmatprep.subr.bf16.mxu0 0
        %668 = vmatpush1.bf16.msra.mxu0 0
        %669 = vmatprep.subr.bf16.mxu0 0
        %670 = vmatpush1.bf16.msra.mxu0 0
        %671 = vmatprep.subr.bf16.mxu0 0
        %672 = vmatpush1.bf16.msra.mxu0 0
        %673 = vmatprep.subr.bf16.mxu0 0
        %674 = vmatpush1.bf16.msra.mxu0 0
        %675 = vmatprep.subr.bf16.mxu0 0
        %676 = vmatpush1.bf16.msra.mxu0 0
        %677 = vmatprep.mubr.bf16.mxu0 0
        %678 = vmatmul.mubr.bf16.gmra.mrb[0].mxu0 %v643
        %v679 = vpop.f32.mrb[0].mxu0
        %v680 = vadd.f32 0.0, %v679
        %v681 = vpop.f32.mrb[0].mxu0
        %v682 = vpop.f32.mrb[0].mxu0
        %v683 = vadd.f32 0.0, %v682
        %v684 = vpop.f32.mrb[0].mxu0
        %685 = vdwg.mxu0
        %v686 = vpack.c.bf16 %v683, %v680
        %688 = vrot.lane.b32.xlu0 %v686, 16
        %v689 = vpop.permute.xlu0 %688
        %vm691 = vcmask 195712
        %692 = vst.msk [vmem:[#allocation3] sm:$0xff] %vm691, %v689
        %v693 = vld [vmem:[#allocation2] sm:$0xff]
        %695 = vrot.lane.b32.xlu0 %v693, 104
        %v696 = vpop.permute.xlu0 %695
        %697 = vrot.lane.b32.xlu0 %v693, 72
        %v698 = vpop.permute.xlu0 %697
        %v700 = vsel %vm312, %v696, 0
        %v703 = vsel %vm312, %v698, 0
        %705 = vmatprep.subr.bf16.mxu0 0
        %706 = vmatpush1.bf16.xpose.msra.mxu0 %v703
        %707 = vmatprep.subr.bf16.mxu0 0
        %708 = vmatpush1.bf16.xpose.msra.mxu0 0
        %709 = vmatprep.subr.bf16.mxu0 0
        %710 = vmatpush1.bf16.xpose.msra.mxu0 0
        %711 = vmatprep.subr.bf16.mxu0 0
        %712 = vmatpush1.bf16.xpose.msra.mxu0 0
        %713 = vmatprep.subr.bf16.mxu0 0
        %714 = vmatpush1.bf16.xpose.msra.mxu0 0
        %715 = vmatprep.subr.bf16.mxu0 0
        %716 = vmatpush1.bf16.xpose.msra.mxu0 0
        %717 = vmatprep.subr.bf16.mxu0 0
        %718 = vmatpush1.bf16.xpose.msra.mxu0 0
        %719 = vmatprep.subr.bf16.mxu0 0
        %720 = vmatpush1.bf16.xpose.msra.mxu0 0
        %721 = vmatprep.subr.bf16.mxu0 0
        %722 = vmatpush1.bf16.xpose.msra.mxu0 0
        %723 = vmatprep.subr.bf16.mxu0 0
        %724 = vmatpush1.bf16.xpose.msra.mxu0 0
        %725 = vmatprep.subr.bf16.mxu0 0
        %726 = vmatpush1.bf16.xpose.msra.mxu0 0
        %727 = vmatprep.subr.bf16.mxu0 0
        %728 = vmatpush1.bf16.xpose.msra.mxu0 0
        %729 = vmatprep.subr.bf16.mxu0 0
        %730 = vmatpush1.bf16.xpose.msra.mxu0 0
        %731 = vmatprep.subr.bf16.mxu0 0
        %732 = vmatpush1.bf16.xpose.msra.mxu0 0
        %733 = vmatprep.subr.bf16.mxu0 0
        %734 = vmatpush1.bf16.xpose.msra.mxu0 0
        %735 = vmatprep.subr.bf16.mxu0 0
        %736 = vmatpush1.bf16.xpose.msra.mxu0 0
        %737 = vmatprep.mubr.bf16.mxu0 0
        %738 = vmatmul.mubr.bf16.gmra.mrb[0].mxu0 %v700
        %v739 = vpop.f32.mrb[0].mxu0
        %v740 = vadd.f32 0.0, %v739
        %v741 = vpop.f32.mrb[0].mxu0
        %v742 = vpop.f32.mrb[0].mxu0
        %v743 = vadd.f32 0.0, %v742
        %v744 = vpop.f32.mrb[0].mxu0
        %745 = vdwg.mxu0
        %v746 = vsel %vm360, %v740, -inf
        %747 = vmax.xlane.f32.xlu0 %v746
        %v748 = vpop.xlane.xlu0 %747
        %v749 = vsel %vm360, %v743, -inf
        %750 = vmax.xlane.f32.xlu0 %v749
        %v751 = vpop.xlane.xlu0 %750
        %v752 = vsub.f32 %v740, %v748
        %v753 = vsub.f32 %v743, %v751
        %v754 = vmul.f32 %v752, 1.442695
        %v755 = vpow.pop %v754
        %v756 = vmul.f32 %v753, 1.442695
        %v757 = vpow.pop %v756
        %v758 = vsel %vm360, %v755, 0.0
        %759 = vadd.xlane.f32.xlu0 %v758
        %v760 = vpop.xlane.xlu0 %759
        %v761 = vsel %vm360, %v757, 0.0
        %762 = vadd.xlane.f32.xlu0 %v761
        %v763 = vpop.xlane.xlu0 %762
        %v764 = vrcp.pop %v760
        %v765 = vrcp.pop %v763
        %v766 = vmul.f32 %v755, %v764
        %v767 = vmul.f32 %v757, %v765
        %v768 = vpack.c.bf16 %v767, %v766
        %769 = vrot.lane.b32.xlu0 %v693, 40
        %v770 = vpop.permute.xlu0 %769
        %v773 = vsel %vm360, %v768, 0
        %775 = vmatprep.subr.bf16.mxu0 0
        %776 = vmatpush1.bf16.msra.mxu0 %v770
        %777 = vmatprep.subr.bf16.mxu0 0
        %778 = vmatpush1.bf16.msra.mxu0 0
        %779 = vmatprep.subr.bf16.mxu0 0
        %780 = vmatpush1.bf16.msra.mxu0 0
        %781 = vmatprep.subr.bf16.mxu0 0
        %782 = vmatpush1.bf16.msra.mxu0 0
        %783 = vmatprep.subr.bf16.mxu0 0
        %784 = vmatpush1.bf16.msra.mxu0 0
        %785 = vmatprep.subr.bf16.mxu0 0
        %786 = vmatpush1.bf16.msra.mxu0 0
        %787 = vmatprep.subr.bf16.mxu0 0
        %788 = vmatpush1.bf16.msra.mxu0 0
        %789 = vmatprep.subr.bf16.mxu0 0
        %790 = vmatpush1.bf16.msra.mxu0 0
        %791 = vmatprep.subr.bf16.mxu0 0
        %792 = vmatpush1.bf16.msra.mxu0 0
        %793 = vmatprep.subr.bf16.mxu0 0
        %794 = vmatpush1.bf16.msra.mxu0 0
        %795 = vmatprep.subr.bf16.mxu0 0
        %796 = vmatpush1.bf16.msra.mxu0 0
        %797 = vmatprep.subr.bf16.mxu0 0
        %798 = vmatpush1.bf16.msra.mxu0 0
        %799 = vmatprep.subr.bf16.mxu0 0
        %800 = vmatpush1.bf16.msra.mxu0 0
        %801 = vmatprep.subr.bf16.mxu0 0
        %802 = vmatpush1.bf16.msra.mxu0 0
        %803 = vmatprep.subr.bf16.mxu0 0
        %804 = vmatpush1.bf16.msra.mxu0 0
        %805 = vmatprep.subr.bf16.mxu0 0
        %806 = vmatpush1.bf16.msra.mxu0 0
        %807 = vmatprep.mubr.bf16.mxu0 0
        %808 = vmatmul.mubr.bf16.gmra.mrb[0].mxu0 %v773
        %v809 = vpop.f32.mrb[0].mxu0
        %v810 = vadd.f32 0.0, %v809
        %v811 = vpop.f32.mrb[0].mxu0
        %v812 = vpop.f32.mrb[0].mxu0
        %v813 = vadd.f32 0.0, %v812
        %v814 = vpop.f32.mrb[0].mxu0
        %815 = vdwg.mxu0
        %v816 = vpack.c.bf16 %v813, %v810
        %818 = vrot.lane.b32.xlu0 %v816, 24
        %v819 = vpop.permute.xlu0 %818
        %vm821 = vcmask 261312
        %822 = vst.msk [vmem:[#allocation3] sm:$0xff] %vm821, %v819
        %v823 = vld [vmem:[#allocation3] sm:$0xff]
        %v824 = vld [vmem:[%s2] sm:$0xf]
        %v825 = vld [vmem:[%s2 + $0x4] sm:$0xf]
        %v826 = vld [vmem:[%s2 + $0x8] sm:$0xf]
        %v827 = vld [vmem:[%s2 + $0xc] sm:$0xf]
        %v828 = vld [vmem:[%s3] sm:$0x1]
        %v830 = vlaneseq
        %v831 = vshrl.u32 %v830, 7
        %v832 = vsub.s32 0, %v831
        %v833 = vrot.slane %v828, %v832
        %v839 = vunpack.c.l.b16 %v824
        %v840 = vunpack.c.l.b16 %v825
        %v841 = vunpack.c.l.b16 %v826
        %v842 = vunpack.c.l.b16 %v827
        %v843 = vpack.c.b16 %v840, %v839
        %v844 = vpack.c.b16 %v842, %v841
        %v846 = vsel %vm242, %v823, 0
        %v849 = vsel %vm242, %v843, 0
        %v852 = vsel %vm242, %v844, 0
        %854 = vmatprep.subr.bf16.mxu0 0
        %855 = vmatpush1.bf16.xpose.msra.mxu0 %v849
        %856 = vmatprep.subr.bf16.mxu0 0
        %857 = vmatpush1.bf16.xpose.msra.mxu0 %v852
        %858 = vmatprep.subr.bf16.mxu0 0
        %859 = vmatpush1.bf16.xpose.msra.mxu0 0
        %860 = vmatprep.subr.bf16.mxu0 0
        %861 = vmatpush1.bf16.xpose.msra.mxu0 0
        %862 = vmatprep.subr.bf16.mxu0 0
        %863 = vmatpush1.bf16.xpose.msra.mxu0 0
        %864 = vmatprep.subr.bf16.mxu0 0
        %865 = vmatpush1.bf16.xpose.msra.mxu0 0
        %866 = vmatprep.subr.bf16.mxu0 0
        %867 = vmatpush1.bf16.xpose.msra.mxu0 0
        %868 = vmatprep.subr.bf16.mxu0 0
        %869 = vmatpush1.bf16.xpose.msra.mxu0 0
        %870 = vmatprep.subr.bf16.mxu0 0
        %871 = vmatpush1.bf16.xpose.msra.mxu0 0
        %872 = vmatprep.subr.bf16.mxu0 0
        %873 = vmatpush1.bf16.xpose.msra.mxu0 0
        %874 = vmatprep.subr.bf16.mxu0 0
        %875 = vmatpush1.bf16.xpose.msra.mxu0 0
        %876 = vmatprep.subr.bf16.mxu0 0
        %877 = vmatpush1.bf16.xpose.msra.mxu0 0
        %878 = vmatprep.subr.bf16.mxu0 0
        %879 = vmatpush1.bf16.xpose.msra.mxu0 0
        %880 = vmatprep.subr.bf16.mxu0 0
        %881 = vmatpush1.bf16.xpose.msra.mxu0 0
        %882 = vmatprep.subr.bf16.mxu0 0
        %883 = vmatpush1.bf16.xpose.msra.mxu0 0
        %884 = vmatprep.subr.bf16.mxu0 0
        %885 = vmatpush1.bf16.xpose.msra.mxu0 0
        %886 = vmatprep.mubr.bf16.mxu0 0
        %887 = vmatmul.mubr.bf16.gmra.mrb[0].mxu0 %v846
        %v888 = vpop.f32.mrb[0].mxu0
        %v889 = vadd.f32 %v833, %v888
        %v890 = vpop.f32.mrb[0].mxu0
        %v891 = vpop.f32.mrb[0].mxu0
        %v892 = vadd.f32 %v833, %v891
        %v893 = vpop.f32.mrb[0].mxu0
        %894 = vdwg.mxu0
        %895 = vst.msk [vmem:[%s190] sm:$0xff] %vm242, %v889
        %896 = vst.msk [vmem:[%s190 + $0x8] sm:$0xff] %vm242, %v892
        %s897 = sand.u32 %s115, 1
        %s898 = scalar_lea.sflag [#allocation5], %s897
        %s899 = sand.u32 %s115, 1
        %s900 = smul.addr %s899, 16
        %s901 = scalar_lea.vmem [#allocation4], %s900
        // Predicated region
        $region37: #{tpu_custom_call.1} parent=35 // pred_check
          %p902 = pneg %p125
        $region38: #{tpu_custom_call.1} parent=35 // pred_check_branch
          %904 = sbr.rel (%p902) target = $region40
        $region39: #{tpu_custom_call.1} parent=35 // pred_region
          %s906 = ssub.s32 256, 256
          %907 = vsyncadd %s898, %s906
          %s908 = smul.addr %s18, 2
          %s909 = smul.addr %s908, 128
          %s910 = scalar_lea.hbm %s4, %s909
          %s911 = sshll.u32 %s901, 4
          %s912 = int_to_ptr.vmem [resolvable:$true] %s911
          %917 = dma.vmem_to_hbm [thread:$0]  %s912, 256, %s910, %s898, 128, 128, 8
        $region40: #{tpu_custom_call.1} parent=35 // pred_fallthru
          _
      $region36: #{tpu_custom_call.1} parent=5 // pred_fallthru
        _
      %p918 = scmp.le.s32.totalorder 2, %s13
      // Predicated region
      $region41: #{tpu_custom_call.1} parent=5 // pred_check
        %p919 = pneg %p918
      $region42: #{tpu_custom_call.1} parent=5 // pred_check_branch
        %921 = sbr.rel (%p919) target = $region44
      $region43: #{tpu_custom_call.1} parent=5 // pred_region
        %s922 = ssub.s32 %s13, 2
        // Predicated region
        $region45: #{tpu_custom_call.1} parent=43 // pred_check
          %p923 = pneg %p131
        $region46: #{tpu_custom_call.1} parent=43 // pred_check_branch
          %925 = sbr.rel (%p923) target = $region48
        $region47: #{tpu_custom_call.1} parent=43 // pred_region
          %s926 = sand.u32 %s116, 1
          %s927 = scalar_lea.sflag [#allocation5], %s926
          %s928 = sand.u32 %s116, 1
          %s929 = smul.addr %s928, 16
          %s930 = scalar_lea.vmem [#allocation4], %s929
          %931 = dma.done %s927, 256
        $region48: #{tpu_custom_call.1} parent=43 // pred_fallthru
          _
      $region44: #{tpu_custom_call.1} parent=5 // pred_fallthru
        _
    $region6: #{tpu_custom_call.1} parent=1 // loop_footer
      %s17 = sadd.s32 1, %s13
    $region7: #{tpu_custom_call.1} parent=1 // loop_footer_branch
      %12 = sbr.rel target = $region3
    $region8: #{tpu_custom_call.1} parent=1 // loop_exit
      _
    %932 = vsyncpa [#allocation5], 1
    %s933 = scalar_lea.sflag [#allocation5], 1
    %934 = vsyncpa %s933, 1

</llo_original>
